<compile_context>
chip_gen: v7x
topology: tpu7x:2x2x1
jax: 0.10.0
libtpu: 0.0.40
codegen_flags: <defaults>
</compile_context>

<pallas_src>
import jax
import jax.numpy as jnp
from jax.experimental import pallas as pl
from jax.experimental.pallas import tpu as pltpu


def _pixel_scale_kernel(s_ref, b_ref, x_ref, o_ref):
    # s_ref / b_ref: (TR, 1) f32 per-row scale / bias (lane-broadcast in block).
    # x_ref / o_ref: (TR, TL) lane-dense data block.
    # Compute in f32 regardless of input dtype; store in output dtype.
    x = x_ref[...].astype(jnp.float32)
    o_ref[...] = (x * s_ref[...] + b_ref[...]).astype(o_ref.dtype)


def _default_target_block_bytes():
    # Bigger blocks amortize the ~0.35 us per-grid-step overhead; keep v5e a bit
    # smaller (16 MiB default scoped VMEM, lower HBM BW -> weaker payoff).
    try:
        kind = jax.devices()[0].device_kind.lower()
    except Exception:
        return 4 * 1024 * 1024
    if "v5 lite" in kind or "v5lite" in kind or "v5e" in kind:
        return 3 * 1024 * 1024
    return 6 * 1024 * 1024


def _choose_tiles(R, L, itemsize, target_block_bytes):
    """Pick (row_tile, lane_tile) so block bytes ~= target and TPU tiling rules
    (second-to-last dim % 8 == 0 or full, last dim % 128 == 0 or full) hold."""
    sublane = {1: 32, 2: 16}.get(itemsize, 8)  # dtype-native sublane multiple
    row_bytes = L * itemsize

    if row_bytes * sublane <= target_block_bytes:
        # A sublane group of full rows fits: tile rows only (lane dim stays full).
        tl = L
        tr = (target_block_bytes // max(1, row_bytes)) // sublane * sublane
        tr = max(sublane, tr)
        if tr >= R:
            tr = R
    else:
        # Rows wider than the target: tile the lane dimension (multiple of 128).
        tr = min(sublane, R)
        tl = (target_block_bytes // max(1, tr * itemsize)) // 128 * 128
        tl = max(128, min(tl, L))
        if tl >= L:
            tl = L

    # Never run a single grid step for non-trivial traffic: >=2 blocks enables
    # pipelining and lets both v7x TensorCores pull work.
    total_bytes = R * L * itemsize
    if total_bytes > 4 * 1024 * 1024 and pl.cdiv(R, tr) * pl.cdiv(L, tl) == 1:
        tr_half = ((R // 2) // sublane) * sublane
        tl_half = ((L // 2) // 128) * 128
        if tr_half >= sublane:
            tr = tr_half
        elif tl_half >= 128:
            tl = tl_half

    return tr, tl


def pixel_scaler(x, scale, bias, *, target_block_bytes=None, donate_input=False):
    """y[n, c, ...] = x[n, c, ...] * scale[c] + bias[c] for channels-first layouts
    (3D: NCL, 4D: NCHW, 5D: NCDHW), matching PixelScaleFunction.forward."""
    orig_shape = x.shape
    N, C = orig_shape[0], orig_shape[1]
    L = 1
    for d in orig_shape[2:]:
        L *= d
    R = N * C
    itemsize = jnp.dtype(x.dtype).itemsize

    if target_block_bytes is None:
        target_block_bytes = _default_target_block_bytes()

    # Parameters stay f32 (the PyTorch module keeps f32 buffers); scalars allowed.
    scale_f32 = jnp.broadcast_to(jnp.asarray(scale, dtype=jnp.float32).reshape(-1), (C,))
    bias_f32 = jnp.broadcast_to(jnp.asarray(bias, dtype=jnp.float32).reshape(-1), (C,))

    # Zero-cost flatten of the contiguous channels-first tensor to a 2D view.
    x2 = x.reshape(R, L)
    # Per-row (n*C + c) parameter columns: row r -> channel r % C.
    row_scale = jnp.tile(scale_f32, N).reshape(R, 1)
    row_bias = jnp.tile(bias_f32, N).reshape(R, 1)

    tr, tl = _choose_tiles(R, L, itemsize, target_block_bytes)
    grid = (pl.cdiv(R, tr), pl.cdiv(L, tl))  # rows outer, lane tiles inner

    # VMEM budget: double-buffered in + out data blocks plus the (tr, 1) param
    # columns (padded to 128 lanes in VMEM), with headroom; capped well under
    # v7x's 64 MiB physical VMEM (v5e/v6e have 128 MiB physical).
    block_bytes = tr * tl * itemsize
    param_bytes = tr * 128 * 4
    vmem_needed = 4 * block_bytes + 4 * param_bytes + (2 << 20)
    vmem_limit = int(min(max(vmem_needed, 32 * 1024 * 1024), 48 * 1024 * 1024))

    kwargs = {}
    if donate_input:
        # Alias the data input (3rd kernel arg) onto the output buffer.
        kwargs["input_output_aliases"] = {2: 0}

    y2 = pl.pallas_call(
        _pixel_scale_kernel,
        out_shape=jax.ShapeDtypeStruct((R, L), x.dtype),
        grid=grid,
        in_specs=[
            pl.BlockSpec((tr, 1), lambda i, j: (i, 0)),   # scale col: invariant over j
            pl.BlockSpec((tr, 1), lambda i, j: (i, 0)),   # bias col: invariant over j
            pl.BlockSpec((tr, tl), lambda i, j: (i, j)),  # data block
        ],
        out_specs=pl.BlockSpec((tr, tl), lambda i, j: (i, j)),
        compiler_params=pltpu.CompilerParams(
            dimension_semantics=("parallel", "parallel"),
            vmem_limit_bytes=vmem_limit),
        **kwargs,
    )(row_scale, row_bias, x2)

    return y2.reshape(orig_shape)


if __name__ == "__main__":
    key = jax.random.PRNGKey(0)
    N, C, H, W = 2, 4, 16, 16

    kx, ks, kb = jax.random.split(key, 3)
    x = jax.random.normal(kx, (N, C, H, W), dtype=jnp.float32)
    # Deterministic "parameters": per-channel scale and bias (module shapes: (C,))
    scale = jax.random.normal(ks, (C,), dtype=jnp.float32) + 1.0
    bias = jax.random.normal(kb, (C,), dtype=jnp.float32)

    # 4D (NCHW) path
    y = jax.block_until_ready(pixel_scaler(x, scale, bias))
    y_ref = x * scale[None, :, None, None] + bias[None, :, None, None]
    assert y.shape == (N, C, H, W)
    assert jnp.allclose(y, y_ref, atol=1e-6, rtol=1e-6)

    # 3D (NCL) path with a non-128-multiple spatial size
    x3 = jax.random.normal(kx, (N, C, 33), dtype=jnp.float32)
    y3 = jax.block_until_ready(pixel_scaler(x3, scale, bias))
    y3_ref = x3 * scale[None, :, None] + bias[None, :, None]
    assert jnp.allclose(y3, y3_ref, atol=1e-6, rtol=1e-6)

    # 5D (NCDHW) path
    x5 = jax.random.normal(kx, (N, C, 4, 8, 8), dtype=jnp.float32)
    y5 = jax.block_until_ready(pixel_scaler(x5, scale, bias))
    y5_ref = x5 * scale[None, :, None, None, None] + bias[None, :, None, None, None]
    assert jnp.allclose(y5, y5_ref, atol=1e-6, rtol=1e-6)

    print("KERNEL_OK")
</pallas_src>

<mosaic_0001>
module attributes {stable_mosaic.version = 11 : i64} {
  func.func @_pixel_scale_kernel(%arg0: i32, %arg1: i32, %arg2: memref<8x1xf32, #tpu.memory_space<vmem>>, %arg3: memref<8x1xf32, #tpu.memory_space<vmem>>, %arg4: memref<8x256xf32, #tpu.memory_space<vmem>>, %arg5: memref<8x256xf32, #tpu.memory_space<vmem>>) attributes {dimension_semantics = [#tpu.dimension_semantics<parallel>, #tpu.dimension_semantics<parallel>], iteration_bounds = array<i64: 1, 1>, scalar_prefetch = 0 : i64, scratch_operands = 0 : i64, tpu.core_type = #tpu.core_type<tc>, window_params = [{transform_indices = @transform_0, window_bounds = array<i64: 8, 1>}, {transform_indices = @transform_1, window_bounds = array<i64: 8, 1>}, {transform_indices = @transform_2, window_bounds = array<i64: 8, 256>}, {transform_indices = @transform_3, window_bounds = array<i64: 8, 256>}]} {
    %c0 = arith.constant 0 : index
    %c0_0 = arith.constant 0 : index
    %0 = vector.load %arg4[%c0, %c0_0] : memref<8x256xf32, #tpu.memory_space<vmem>>, vector<8x256xf32>
    %c0_1 = arith.constant 0 : index
    %c0_2 = arith.constant 0 : index
    %1 = vector.load %arg2[%c0_1, %c0_2] : memref<8x1xf32, #tpu.memory_space<vmem>>, vector<8x1xf32>
    %2 = vector.broadcast %1 : vector<8x1xf32> to vector<8x256xf32>
    %3 = arith.mulf %0, %2 : vector<8x256xf32>
    %c0_3 = arith.constant 0 : index
    %c0_4 = arith.constant 0 : index
    %4 = vector.load %arg3[%c0_3, %c0_4] : memref<8x1xf32, #tpu.memory_space<vmem>>, vector<8x1xf32>
    %5 = vector.broadcast %4 : vector<8x1xf32> to vector<8x256xf32>
    %6 = arith.addf %3, %5 : vector<8x256xf32>
    %c0_5 = arith.constant 0 : index
    %c0_6 = arith.constant 0 : index
    %7 = vector.load %arg5[%c0_5, %c0_6] : memref<8x256xf32, #tpu.memory_space<vmem>>, vector<8x256xf32>
    tpu.vector_store %arg5[%c0_5, %c0_6], %6 {strides = array<i32>} : memref<8x256xf32, #tpu.memory_space<vmem>>, vector<8x256xf32>,
    return
  }
  func.func @transform_0(%arg0: i32, %arg1: i32) -> (i32, i32) {
    %c0_i32 = arith.constant 0 : i32
    %c0_i32_0 = arith.constant 0 : i32
    return %arg0, %c0_i32 : i32, i32
  }
  func.func @transform_1(%arg0: i32, %arg1: i32) -> (i32, i32) {
    %c0_i32 = arith.constant 0 : i32
    %c0_i32_0 = arith.constant 0 : i32
    return %arg0, %c0_i32 : i32, i32
  }
  func.func @transform_2(%arg0: i32, %arg1: i32) -> (i32, i32) {
    %c0_i32 = arith.constant 0 : i32
    return %arg0, %arg1 : i32, i32
  }
  func.func @transform_3(%arg0: i32, %arg1: i32) -> (i32, i32) {
    %c0_i32 = arith.constant 0 : i32
    return %arg0, %arg1 : i32, i32
  }
}

</mosaic_0001>

<llo_original>
// kernel: tpu_custom_call.1
$region0: #{tpu_custom_call.1}
  #allocation0 [shape = 'u32[]', space=smem, size = 0x4, offset = 0x4, fixed_abs, tag = 'smem constant byte address 0x4 - core index']
  #allocation1 [shape = 'u32[144,128]{1,0:T(1,128)}', space=vmem, size = 0x12000, scoped, tag = 'internal scratch']
  %s0 = inlined_call_operand.vmem [shape: f32[8,1], index: 0, kind: input, shape index: {}]
  %s1 = inlined_call_operand.vmem [shape: f32[8,1], index: 1, kind: input, shape index: {}]
  %s2 = inlined_call_operand.vmem [shape: f32[8,256], index: 2, kind: input, shape index: {}]
  %s3 = inlined_call_operand.hbm [shape: f32[8,256], index: 3, kind: output, shape index: {}]
  %s4 = sld [smem:[#allocation0]]
  $region22: #{tpu_custom_call.1} parent=0
    _
  %s6 = ssub.s32 1, %s4
  %s7 = scalar_select 0, %s6, %s4
  $region1: #{tpu_custom_call.1} parent=0
    #allocation2 [shape = 'u8[8192]{0}', space=vmem, size = 0x2000, scoped, tag = 'output window, operand 0, single buffered']
    #allocation3 [shape = 's32[1]{0}', space=sflag, size = 0x4, scoped, tag = 'scoped memory for tpu_custom_call.1']
    %8 = vsyncpa [#allocation3], 0
    // Predicated region
    $region2: #{tpu_custom_call.1} parent=1 // pred_check
      _
    $region3: #{tpu_custom_call.1} parent=1 // pred_check_branch
      %10 = sbr.rel (0) target = $region5
    $region4: #{tpu_custom_call.1} parent=1 // pred_region
      _
    $region5: #{tpu_custom_call.1} parent=1 // pred_fallthru
      _
    // Predicated region
    $region6: #{tpu_custom_call.1} parent=1 // pred_check
      _
    $region7: #{tpu_custom_call.1} parent=1 // pred_check_branch
      %12 = sbr.rel (0) target = $region9
    $region8: #{tpu_custom_call.1} parent=1 // pred_region
      _
    $region9: #{tpu_custom_call.1} parent=1 // pred_fallthru
      _
    // Predicated region
    $region10: #{tpu_custom_call.1} parent=1 // pred_check
      _
    $region11: #{tpu_custom_call.1} parent=1 // pred_check_branch
      %14 = sbr.rel (0) target = $region13
    $region12: #{tpu_custom_call.1} parent=1 // pred_region
      _
    $region13: #{tpu_custom_call.1} parent=1 // pred_fallthru
      _
    %v15 = vld [vmem:[%s2] sm:$0xff]
    %v16 = vld [vmem:[%s2 + $0x8] sm:$0xff]
    %v17 = vld [vmem:[%s0] sm:$0xff]
    %19 = vset.pattern.permute.xlu0 0
    %20 = vperm.xlu0 %19, %v17
    %v21 = vpop.permute.xlu0 %20
    %v23 = vmul.f32 %v15, %v21
    %v24 = vmul.f32 %v16, %v21
    %v25 = vld [vmem:[%s1] sm:$0xff]
    %27 = vset.pattern.permute.xlu0 0
    %28 = vperm.xlu0 %27, %v25
    %v29 = vpop.permute.xlu0 %28
    %v31 = vadd.f32 %v23, %v29
    %v32 = vadd.f32 %v24, %v29
    %33 = vst [vmem:[#allocation2] sm:$0xff] %v31
    %34 = vst [vmem:[#allocation2 + $0x8] sm:$0xff] %v32
    // Predicated region
    $region14: #{tpu_custom_call.1} parent=1 // pred_check
      _
    $region15: #{tpu_custom_call.1} parent=1 // pred_check_branch
      %36 = sbr.rel (0) target = $region17
    $region16: #{tpu_custom_call.1} parent=1 // pred_region
      %s38 = ssub.s32 256, 256
      %39 = vsyncadd [#allocation3], %s38
      %s41 = sshll.u32 [#allocation2], 4
      %s42 = int_to_ptr.vmem [resolvable:$true] %s41
      %44 = dma.vmem_to_hbm [thread:$0]  %s42, 256, %s3, [#allocation3]
    $region17: #{tpu_custom_call.1} parent=1 // pred_fallthru
      _
    // Predicated region
    $region18: #{tpu_custom_call.1} parent=1 // pred_check
      _
    $region19: #{tpu_custom_call.1} parent=1 // pred_check_branch
      %46 = sbr.rel (0) target = $region21
    $region20: #{tpu_custom_call.1} parent=1 // pred_region
      %47 = dma.done [#allocation3], 256
    $region21: #{tpu_custom_call.1} parent=1 // pred_fallthru
      _
    %48 = vsyncpa [#allocation3], 1

</llo_original>
